<compile_context>
chip_gen: v7x
topology: tpu7x:2x2x1
jax: 0.10.0
libtpu: 0.0.40
codegen_flags: <defaults>
</compile_context>

<pallas_src>
import functools

import jax
import jax.numpy as jnp
from jax.experimental import pallas as pl
from jax.experimental.pallas import tpu as pltpu

NORM_EPS = 1e-12  # F.normalize default eps (clamp_min applied to the norm)


def _vmem_capacity_bytes():
    """Best-effort physical VMEM query; falls back to the smallest (v7x) size."""
    try:
        info = pltpu.get_tpu_info()
        cap = int(getattr(info, "vmem_capacity_bytes", 0))
        if cap > 0:
            return cap
    except Exception:
        pass
    return 64 << 20  # v7x per-TC VMEM — a safe lower bound on every generation


def _default_num_cores():
    """Best-effort TensorCore count (2 on v7x, 1 on v5e/v6e)."""
    try:
        info = pltpu.get_tpu_info()
        for attr in ("num_tensorcores", "tensorcore_count", "num_cores"):
            v = getattr(info, attr, None)
            if v:
                return max(1, min(int(v), 2))
    except Exception:
        pass
    return 1


def _derive_tile_rows(d, dtype_bytes, vmem_limit_bytes):
    """Largest row tile whose double-buffered stream + f32 temps fit the budget.

    Stream: 2 pipeline buffers of the (2, tb, d) z block in the input dtype.
    Temps : ~4*tb*d f32 in-kernel (upcasts / products before the row reductions).
    Spend ~60% of the scoped VMEM limit on the tile; leave headroom for the
    compiler's own scratch.
    """
    budget = int(vmem_limit_bytes * 0.6)
    per_row = 2 * 2 * d * dtype_bytes + 4 * d * 4
    tb = budget // max(per_row, 1)
    tb = max(8, (tb // 8) * 8)
    return min(tb, 4096)


def _contrastive_kernel(z_ref, t_ref, attr_ref, rep_ref, *,
                        margin, eps, total_b, tile_b, steps_per_core,
                        mask_start, need_mask):
    c = pl.program_id(0)   # TensorCore split ("parallel")
    i = pl.program_id(1)   # batch-tile accumulation axis ("arbitrary")

    @pl.when(i == 0)
    def _init():
        attr_ref[...] = jnp.zeros_like(attr_ref)
        rep_ref[...] = jnp.zeros_like(rep_ref)

    z1 = z_ref[0].astype(jnp.float32)      # (TB, D)
    z2 = z_ref[1].astype(jnp.float32)      # (TB, D)
    t = t_ref[...].astype(jnp.float32)     # (TB, 1)

    # Three row reductions — no normalized (TB, D) temporaries, no (TB, D) divides.
    s1 = jnp.sum(z1 * z1, axis=1, keepdims=True)    # ||z1||^2
    s2 = jnp.sum(z2 * z2, axis=1, keepdims=True)    # ||z2||^2
    s12 = jnp.sum(z1 * z2, axis=1, keepdims=True)   # z1 . z2

    e2 = NORM_EPS * NORM_EPS
    inv_e2 = 1.0 / e2
    # s / max(s, e2) is exactly 1.0 unless the norm got clamped -> select, no divide.
    r1 = jnp.where(s1 >= e2, 1.0, s1 * inv_e2)
    r2 = jnp.where(s2 >= e2, 1.0, s2 * inv_e2)
    inv_n1 = jax.lax.rsqrt(jnp.maximum(s1, e2))
    inv_n2 = jax.lax.rsqrt(jnp.maximum(s2, e2))
    # ||z1/max(|z1|,eps) - z2/max(|z2|,eps)||^2
    dist_sq = jnp.maximum(r1 + r2 - 2.0 * s12 * (inv_n1 * inv_n2), 0.0)
    dist = jnp.sqrt(dist_sq + eps)

    attr = t * dist_sq                                          # (TB, 1)
    rep = (1.0 - t) * jnp.maximum(margin - dist, 0.0) ** 2      # (TB, 1)

    if need_mask:
        blk = c * steps_per_core + i   # unclamped global block index

        @pl.when(blk < mask_start)
        def _full_tile():
            attr_ref[...] += jnp.sum(attr).reshape(1, 1, 1)
            rep_ref[...] += jnp.sum(rep).reshape(1, 1, 1)

        @pl.when(blk >= mask_start)
        def _masked_tile():
            row = blk * tile_b + jax.lax.broadcasted_iota(
                jnp.int32, (tile_b, 1), 0)
            valid = row < total_b
            attr_ref[...] += jnp.sum(jnp.where(valid, attr, 0.0)).reshape(1, 1, 1)
            rep_ref[...] += jnp.sum(jnp.where(valid, rep, 0.0)).reshape(1, 1, 1)
    else:
        attr_ref[...] += jnp.sum(attr).reshape(1, 1, 1)
        rep_ref[...] += jnp.sum(rep).reshape(1, 1, 1)


def contrastive_loss(output, target, *, margin=1.0, eps=1e-6,
                     block_rows=None, num_cores=None):
    """output: (2, B, D) embeddings (f32 or bf16); target: (B,) {0,1} labels."""
    two, b, d = output.shape
    assert two == 2, "expected stacked pair of embeddings (2, B, D)"
    t2d = target.reshape(b, 1).astype(jnp.float32)

    cap = _vmem_capacity_bytes()
    vmem_limit = int(cap * 3) // 4   # 96 MiB on v5e/v6e (128 MiB), 48 MiB on v7x

    dtype_bytes = jnp.dtype(output.dtype).itemsize
    if block_rows is None:
        block_rows = _derive_tile_rows(d, dtype_bytes, vmem_limit)
    # Whole batch in one tile when it fits, else a multiple-of-8 row tile.
    tb = b if b <= block_rows else max(8, (block_rows // 8) * 8)

    n_blocks = pl.cdiv(b, tb)
    nc = num_cores if num_cores is not None else _default_num_cores()
    nc = max(1, min(int(nc), n_blocks))
    # Never silently drop the core split: pad the block count up to a multiple
    # of nc; padded steps re-read (clamped) the last real block and are masked.
    n_blocks_pad = pl.cdiv(n_blocks, nc) * nc
    steps = n_blocks_pad // nc

    padded = n_blocks_pad > n_blocks
    ragged = (b % tb) != 0
    need_mask = padded or ragged
    mask_start = b // tb            # first (unclamped) block index needing a mask
    last_blk = n_blocks - 1

    if padded:
        def z_map(c, i):
            return (0, jnp.minimum(c * steps + i, last_blk), 0)

        def t_map(c, i):
            return (jnp.minimum(c * steps + i, last_blk), 0)
    else:
        def z_map(c, i):
            return (0, c * steps + i, 0)

        def t_map(c, i):
            return (c * steps + i, 0)

    kernel = functools.partial(
        _contrastive_kernel,
        margin=float(margin), eps=float(eps),
        total_b=b, tile_b=tb, steps_per_core=steps,
        mask_start=mask_start, need_mask=need_mask)

    part = jax.ShapeDtypeStruct((nc, 1, 1), jnp.float32)
    cost = pl.CostEstimate(
        flops=6 * b * d + 24 * b,
        transcendentals=3 * b,
        bytes_accessed=output.size * dtype_bytes + t2d.size * 4 + 2 * nc * 4,
    )

    attr_p, rep_p = pl.pallas_call(
        kernel,
        out_shape=(part, part),
        grid=(nc, steps),
        in_specs=[
            pl.BlockSpec((2, tb, d), z_map),   # streamed z1/z2 pair per tile
            pl.BlockSpec((tb, 1), t_map),
        ],
        out_specs=(
            pl.BlockSpec((1, 1, 1), lambda c, i: (c, 0, 0)),
            pl.BlockSpec((1, 1, 1), lambda c, i: (c, 0, 0)),
        ),
        compiler_params=pltpu.CompilerParams(
            dimension_semantics=("parallel", "arbitrary"),
            vmem_limit_bytes=vmem_limit),
        cost_estimate=cost,
    )(output, t2d)

    inv_b = 1.0 / b   # true batch size, not the (possibly padded) tile count
    attr_mean = jnp.sum(attr_p) * inv_b
    rep_mean = jnp.sum(rep_p) * inv_b
    return attr_mean + rep_mean, attr_mean, rep_mean


def _reference(output, target, margin=1.0, eps=1e-6):
    z1, z2 = output[0].astype(jnp.float32), output[1].astype(jnp.float32)
    z1 = z1 / jnp.maximum(jnp.linalg.norm(z1, axis=1, keepdims=True), NORM_EPS)
    z2 = z2 / jnp.maximum(jnp.linalg.norm(z2, axis=1, keepdims=True), NORM_EPS)
    dist_sq = jnp.sum((z1 - z2) ** 2, axis=1)
    dist = jnp.sqrt(dist_sq + eps)
    attr = target * dist_sq
    rep = (1.0 - target) * jnp.maximum(margin - dist, 0.0) ** 2
    return jnp.mean(attr + rep), jnp.mean(attr), jnp.mean(rep)


if __name__ == "__main__":
    key = jax.random.PRNGKey(0)
    k1, k2, k3, k4 = jax.random.split(key, 4)

    # Case 1: default path — VMEM-budget tile holds the whole (small) batch.
    B1, D1 = 16, 32
    out1 = jax.random.normal(k1, (2, B1, D1), dtype=jnp.float32)
    tgt1 = (jax.random.uniform(k2, (B1,)) > 0.5).astype(jnp.float32)
    got1 = contrastive_loss(out1, tgt1)
    jax.block_until_ready(got1)
    ref1 = _reference(out1, tgt1)
    for g, r in zip(got1, ref1):
        assert jnp.allclose(g, r, atol=1e-5, rtol=1e-5), (g, r)

    # Case 2: forced tiling + 2-way core split with an odd, ragged block count
    # (exercises grid padding, block-index clamping and the last-block mask).
    B2, D2 = 20, 32
    out2 = jax.random.normal(k3, (2, B2, D2), dtype=jnp.float32)
    tgt2 = (jax.random.uniform(k4, (B2,)) > 0.5).astype(jnp.float32)
    got2 = contrastive_loss(out2, tgt2, block_rows=8, num_cores=2)
    jax.block_until_ready(got2)
    ref2 = _reference(out2, tgt2)
    for g, r in zip(got2, ref2):
        assert jnp.allclose(g, r, atol=1e-5, rtol=1e-5), (g, r)

    print("KERNEL_OK")
</pallas_src>

<mosaic_0001>
module attributes {stable_mosaic.version = 11 : i64} {
  func.func @_contrastive_kernel(%arg0: i32, %arg1: i32, %arg2: memref<2x16x32xf32, #tpu.memory_space<vmem>>, %arg3: memref<16x1xf32, #tpu.memory_space<vmem>>, %arg4: memref<1x1x1xf32, #tpu.memory_space<vmem>>, %arg5: memref<1x1x1xf32, #tpu.memory_space<vmem>>) attributes {dimension_semantics = [#tpu.dimension_semantics<parallel>, #tpu.dimension_semantics<arbitrary>], iteration_bounds = array<i64: 1, 1>, scalar_prefetch = 0 : i64, scratch_operands = 0 : i64, tpu.core_type = #tpu.core_type<tc>, window_params = [{transform_indices = @transform_0, window_bounds = array<i64: 2, 16, 32>}, {transform_indices = @transform_1, window_bounds = array<i64: 16, 1>}, {transform_indices = @transform_2, window_bounds = array<i64: 1, 1, 1>}, {transform_indices = @transform_3, window_bounds = array<i64: 1, 1, 1>}]} {
    %c0_i32 = arith.constant 0 : i32
    %0 = arith.cmpi eq, %arg1, %c0_i32 : i32
    %1 = arith.extui %0 : i1 to i32
    %c0_i32_0 = arith.constant 0 : i32
    %2 = arith.cmpi ne, %1, %c0_i32_0 : i32
    scf.if %2 {
      %cst_37 = arith.constant 0.000000e+00 : f32
      %71 = vector.broadcast %cst_37 : f32 to vector<1x1x1xf32>
      %c0_38 = arith.constant 0 : index
      %c0_39 = arith.constant 0 : index
      %c0_40 = arith.constant 0 : index
      %72 = vector.load %arg4[%c0_38, %c0_39, %c0_40] : memref<1x1x1xf32, #tpu.memory_space<vmem>>, vector<1x1x1xf32>
      tpu.vector_store %arg4[%c0_38, %c0_39, %c0_40], %71 {strides = array<i32>} : memref<1x1x1xf32, #tpu.memory_space<vmem>>, vector<1x1x1xf32>,
      %cst_41 = arith.constant 0.000000e+00 : f32
      %73 = vector.broadcast %cst_41 : f32 to vector<1x1x1xf32>
      %c0_42 = arith.constant 0 : index
      %c0_43 = arith.constant 0 : index
      %c0_44 = arith.constant 0 : index
      %74 = vector.load %arg5[%c0_42, %c0_43, %c0_44] : memref<1x1x1xf32, #tpu.memory_space<vmem>>, vector<1x1x1xf32>
      tpu.vector_store %arg5[%c0_42, %c0_43, %c0_44], %73 {strides = array<i32>} : memref<1x1x1xf32, #tpu.memory_space<vmem>>, vector<1x1x1xf32>,
    } else {
    }
    %c0 = arith.constant 0 : index
    %c0_1 = arith.constant 0 : index
    %c0_2 = arith.constant 0 : index
    %3 = vector.load %arg2[%c0, %c0_1, %c0_2] : memref<2x16x32xf32, #tpu.memory_space<vmem>>, vector<1x16x32xf32>
    %4 = vector.shape_cast %3 : vector<1x16x32xf32> to vector<16x32xf32>
    %c1 = arith.constant 1 : index
    %c0_3 = arith.constant 0 : index
    %c0_4 = arith.constant 0 : index
    %5 = vector.load %arg2[%c1, %c0_3, %c0_4] : memref<2x16x32xf32, #tpu.memory_space<vmem>>, vector<1x16x32xf32>
    %6 = vector.shape_cast %5 : vector<1x16x32xf32> to vector<16x32xf32>
    %c0_5 = arith.constant 0 : index
    %c0_6 = arith.constant 0 : index
    %7 = vector.load %arg3[%c0_5, %c0_6] : memref<16x1xf32, #tpu.memory_space<vmem>>, vector<16x1xf32>
    %8 = arith.mulf %4, %4 : vector<16x32xf32>
    %cst = arith.constant dense<0.000000e+00> : vector<16xf32>
    %9 = vector.multi_reduction <add>, %8, %cst [1] : vector<16x32xf32> to vector<16xf32>
    %10 = vector.shape_cast %9 : vector<16xf32> to vector<16x1xf32>
    %11 = arith.mulf %6, %6 : vector<16x32xf32>
    %cst_7 = arith.constant dense<0.000000e+00> : vector<16xf32>
    %12 = vector.multi_reduction <add>, %11, %cst_7 [1] : vector<16x32xf32> to vector<16xf32>
    %13 = vector.shape_cast %12 : vector<16xf32> to vector<16x1xf32>
    %14 = arith.mulf %4, %6 : vector<16x32xf32>
    %cst_8 = arith.constant dense<0.000000e+00> : vector<16xf32>
    %15 = vector.multi_reduction <add>, %14, %cst_8 [1] : vector<16x32xf32> to vector<16xf32>
    %16 = vector.shape_cast %15 : vector<16xf32> to vector<16x1xf32>
    %cst_9 = arith.constant 1.000000e-24 : f32
    %17 = vector.broadcast %cst_9 : f32 to vector<16x1xf32>
    %18 = arith.cmpf oge, %10, %17 : vector<16x1xf32>
    %cst_10 = arith.constant 1.000000e+24 : f32
    %19 = vector.broadcast %cst_10 : f32 to vector<16x1xf32>
    %20 = arith.mulf %10, %19 : vector<16x1xf32>
    %cst_11 = arith.constant 1.000000e+00 : f32
    %21 = vector.broadcast %cst_11 : f32 to vector<16x1xf32>
    %22 = arith.select %18, %21, %20 : vector<16x1xi1>, vector<16x1xf32>
    %cst_12 = arith.constant 1.000000e-24 : f32
    %23 = vector.broadcast %cst_12 : f32 to vector<16x1xf32>
    %24 = arith.cmpf oge, %13, %23 : vector<16x1xf32>
    %cst_13 = arith.constant 1.000000e+24 : f32
    %25 = vector.broadcast %cst_13 : f32 to vector<16x1xf32>
    %26 = arith.mulf %13, %25 : vector<16x1xf32>
    %cst_14 = arith.constant 1.000000e+00 : f32
    %27 = vector.broadcast %cst_14 : f32 to vector<16x1xf32>
    %28 = arith.select %24, %27, %26 : vector<16x1xi1>, vector<16x1xf32>
    %cst_15 = arith.constant 1.000000e-24 : f32
    %29 = vector.broadcast %cst_15 : f32 to vector<16x1xf32>
    %30 = arith.maximumf %10, %29 : vector<16x1xf32>
    %31 = math.rsqrt %30 : vector<16x1xf32>
    %cst_16 = arith.constant 1.000000e-24 : f32
    %32 = vector.broadcast %cst_16 : f32 to vector<16x1xf32>
    %33 = arith.maximumf %13, %32 : vector<16x1xf32>
    %34 = math.rsqrt %33 : vector<16x1xf32>
    %35 = arith.addf %22, %28 : vector<16x1xf32>
    %cst_17 = arith.constant 2.000000e+00 : f32
    %36 = vector.broadcast %cst_17 : f32 to vector<16x1xf32>
    %37 = arith.mulf %36, %16 : vector<16x1xf32>
    %38 = arith.mulf %31, %34 : vector<16x1xf32>
    %39 = arith.mulf %37, %38 : vector<16x1xf32>
    %40 = arith.subf %35, %39 : vector<16x1xf32>
    %cst_18 = arith.constant 0.000000e+00 : f32
    %41 = vector.broadcast %cst_18 : f32 to vector<16x1xf32>
    %42 = arith.maximumf %40, %41 : vector<16x1xf32>
    %cst_19 = arith.constant 9.99999997E-7 : f32
    %43 = vector.broadcast %cst_19 : f32 to vector<16x1xf32>
    %44 = arith.addf %42, %43 : vector<16x1xf32>
    %45 = math.sqrt %44 : vector<16x1xf32>
    %46 = arith.mulf %7, %42 : vector<16x1xf32>
    %cst_20 = arith.constant 1.000000e+00 : f32
    %47 = vector.broadcast %cst_20 : f32 to vector<16x1xf32>
    %48 = arith.subf %47, %7 : vector<16x1xf32>
    %cst_21 = arith.constant 1.000000e+00 : f32
    %49 = vector.broadcast %cst_21 : f32 to vector<16x1xf32>
    %50 = arith.subf %49, %45 : vector<16x1xf32>
    %cst_22 = arith.constant 0.000000e+00 : f32
    %51 = vector.broadcast %cst_22 : f32 to vector<16x1xf32>
    %52 = arith.maximumf %50, %51 : vector<16x1xf32>
    %53 = arith.mulf %52, %52 : vector<16x1xf32>
    %54 = arith.mulf %48, %53 : vector<16x1xf32>
    %c0_23 = arith.constant 0 : index
    %c0_24 = arith.constant 0 : index
    %c0_25 = arith.constant 0 : index
    %55 = vector.load %arg4[%c0_23, %c0_24, %c0_25] : memref<1x1x1xf32, #tpu.memory_space<vmem>>, vector<1x1x1xf32>
    %56 = vector.shape_cast %46 : vector<16x1xf32> to vector<1x16x1xf32>
    %cst_26 = arith.constant dense<0.000000e+00> : vector<1xf32>
    %57 = vector.multi_reduction <add>, %56, %cst_26 [1, 2] : vector<1x16x1xf32> to vector<1xf32>
    %58 = vector.shape_cast %57 : vector<1xf32> to vector<1x1x1xf32>
    %59 = vector.extract %58[0, 0, 0] : f32 from vector<1x1x1xf32>
    %60 = vector.broadcast %59 : f32 to vector<1x1x1xf32>
    %61 = arith.addf %55, %60 : vector<1x1x1xf32>
    %c0_27 = arith.constant 0 : index
    %c0_28 = arith.constant 0 : index
    %c0_29 = arith.constant 0 : index
    %62 = vector.load %arg4[%c0_27, %c0_28, %c0_29] : memref<1x1x1xf32, #tpu.memory_space<vmem>>, vector<1x1x1xf32>
    tpu.vector_store %arg4[%c0_27, %c0_28, %c0_29], %61 {strides = array<i32>} : memref<1x1x1xf32, #tpu.memory_space<vmem>>, vector<1x1x1xf32>,
    %c0_30 = arith.constant 0 : index
    %c0_31 = arith.constant 0 : index
    %c0_32 = arith.constant 0 : index
    %63 = vector.load %arg5[%c0_30, %c0_31, %c0_32] : memref<1x1x1xf32, #tpu.memory_space<vmem>>, vector<1x1x1xf32>
    %64 = vector.shape_cast %54 : vector<16x1xf32> to vector<1x16x1xf32>
    %cst_33 = arith.constant dense<0.000000e+00> : vector<1xf32>
    %65 = vector.multi_reduction <add>, %64, %cst_33 [1, 2] : vector<1x16x1xf32> to vector<1xf32>
    %66 = vector.shape_cast %65 : vector<1xf32> to vector<1x1x1xf32>
    %67 = vector.extract %66[0, 0, 0] : f32 from vector<1x1x1xf32>
    %68 = vector.broadcast %67 : f32 to vector<1x1x1xf32>
    %69 = arith.addf %63, %68 : vector<1x1x1xf32>
    %c0_34 = arith.constant 0 : index
    %c0_35 = arith.constant 0 : index
    %c0_36 = arith.constant 0 : index
    %70 = vector.load %arg5[%c0_34, %c0_35, %c0_36] : memref<1x1x1xf32, #tpu.memory_space<vmem>>, vector<1x1x1xf32>
    tpu.vector_store %arg5[%c0_34, %c0_35, %c0_36], %69 {strides = array<i32>} : memref<1x1x1xf32, #tpu.memory_space<vmem>>, vector<1x1x1xf32>,
    return
  }
  func.func @transform_0(%arg0: i32, %arg1: i32) -> (i32, i32, i32) {
    %c1_i32 = arith.constant 1 : i32
    %0 = arith.muli %arg0, %c1_i32 : i32
    %1 = arith.addi %0, %arg1 : i32
    %c0_i32 = arith.constant 0 : i32
    %c0_i32_0 = arith.constant 0 : i32
    %c0_i32_1 = arith.constant 0 : i32
    return %c0_i32, %1, %c0_i32_0 : i32, i32, i32
  }
  func.func @transform_1(%arg0: i32, %arg1: i32) -> (i32, i32) {
    %c1_i32 = arith.constant 1 : i32
    %0 = arith.muli %arg0, %c1_i32 : i32
    %1 = arith.addi %0, %arg1 : i32
    %c0_i32 = arith.constant 0 : i32
    %c0_i32_0 = arith.constant 0 : i32
    return %1, %c0_i32 : i32, i32
  }
  func.func @transform_2(%arg0: i32, %arg1: i32) -> (i32, i32, i32) {
    %c0_i32 = arith.constant 0 : i32
    %c0_i32_0 = arith.constant 0 : i32
    %c0_i32_1 = arith.constant 0 : i32
    return %arg0, %c0_i32, %c0_i32_0 : i32, i32, i32
  }
  func.func @transform_3(%arg0: i32, %arg1: i32) -> (i32, i32, i32) {
    %c0_i32 = arith.constant 0 : i32
    %c0_i32_0 = arith.constant 0 : i32
    %c0_i32_1 = arith.constant 0 : i32
    return %arg0, %c0_i32, %c0_i32_0 : i32, i32, i32
  }
}

</mosaic_0001>

<llo_original>
// kernel: tpu_custom_call.1
$region0: #{tpu_custom_call.1}
  #allocation0 [shape = 'u32[]', space=smem, size = 0x4, offset = 0x4, fixed_abs, tag = 'smem constant byte address 0x4 - core index']
  #allocation1 [shape = 'u32[144,128]{1,0:T(1,128)}', space=vmem, size = 0x12000, scoped, tag = 'internal scratch']
  %s0 = inlined_call_operand.hbm [shape: f32[2,16,32], index: 0, kind: input, shape index: {}]
  %s1 = inlined_call_operand.vmem [shape: f32[16,1], index: 1, kind: input, shape index: {}]
  %s2 = inlined_call_operand.hbm [shape: f32[1,1,1], index: 2, kind: output, shape index: {0}]
  %s3 = inlined_call_operand.hbm [shape: f32[1,1,1], index: 3, kind: output, shape index: {1}]
  %4 = xla_tuple %s2, %s3
  %s5 = sld [smem:[#allocation0]]
  $region34: #{tpu_custom_call.1} parent=0
    _
  %s7 = ssub.s32 1, %s5
  %s8 = scalar_select 0, %s7, %s5
  $region1: #{tpu_custom_call.1} parent=0
    #allocation2 [shape = 'u8[16384]{0}', space=vmem, size = 0x4000, scoped, tag = 'input window, operand 0, single buffered']
    #allocation3 [shape = 's32[1]{0}', space=sflag, size = 0x4, scoped, tag = 'scoped memory for tpu_custom_call.1']
    #allocation4 [shape = 's32[1]{0}', space=sflag, size = 0x4, scoped, tag = 'scoped memory for tpu_custom_call.1']
    #allocation5 [shape = 'u8[512]{0}', space=vmem, size = 0x400, scoped, tag = 'output window, operand 0, single buffered']
    #allocation6 [shape = 'u8[512]{0}', space=vmem, size = 0x400, scoped, tag = 'output window, operand 1, single buffered']
    #allocation7 [shape = 's32[1]{0}', space=sflag, size = 0x4, scoped, tag = 'scoped memory for tpu_custom_call.1']
    %9 = vsyncpa [#allocation3], 0
    %10 = vsyncpa [#allocation4], 0
    %11 = vsyncpa [#allocation7], 0
    // Predicated region
    $region2: #{tpu_custom_call.1} parent=1 // pred_check
      _
    $region3: #{tpu_custom_call.1} parent=1 // pred_check_branch
      %13 = sbr.rel (0) target = $region5
    $region4: #{tpu_custom_call.1} parent=1 // pred_region
      %s14 = sadd.s32 0, 0
      %s15 = smul.u32 2, %s14
      %s17 = ssub.s32 512, 512
      %18 = vsyncadd [#allocation3], %s17
      %s19 = smul.addr %s15, 128
      %s20 = scalar_lea.hbm %s0, %s19
      %s21 = sshll.u32 [#allocation2], 4
      %s22 = int_to_ptr.vmem [resolvable:$true] %s21
      %27 = dma.hbm_to_vmem [thread:$0]  %s20, 512, %s22, [#allocation3], 128, 128, 8
    $region5: #{tpu_custom_call.1} parent=1 // pred_fallthru
      _
    // Predicated region
    $region6: #{tpu_custom_call.1} parent=1 // pred_check
      _
    $region7: #{tpu_custom_call.1} parent=1 // pred_check_branch
      %29 = sbr.rel (0) target = $region9
    $region8: #{tpu_custom_call.1} parent=1 // pred_region
      %s30 = sadd.s32 0, 0
      %s31 = smul.u32 2, %s30
      %p32 = scmp.lt.s32.totalorder %s31, 1
      %s33 = scalar_select %p32, %s31, 1
      %s34 = smul.addr %s33, 8
      %s35 = scalar_lea.vmem %s1, %s34
      %s36 = sadd.s32 0, 0
      %s37 = smul.u32 2, %s36
    $region9: #{tpu_custom_call.1} parent=1 // pred_fallthru
      _
    // Predicated region
    $region10: #{tpu_custom_call.1} parent=1 // pred_check
      _
    $region11: #{tpu_custom_call.1} parent=1 // pred_check_branch
      %39 = sbr.rel (0) target = $region13
    $region12: #{tpu_custom_call.1} parent=1 // pred_region
      %40 = dma.done [#allocation3], 512
    $region13: #{tpu_custom_call.1} parent=1 // pred_fallthru
      _
    %s41 = sadd.s32 0, 0
    %s42 = smul.u32 2, %s41
    %p43 = scmp.lt.s32.totalorder %s42, 1
    %s44 = scalar_select %p43, %s42, 1
    %s45 = smul.addr %s44, 8
    %s46 = scalar_lea.vmem %s1, %s45
    %s47 = sadd.s32 0, 0
    %s48 = smul.u32 2, %s47
    %s49 = sadd.s32 0, 0
    %s50 = smul.u32 2, %s49
    %p51 = scmp.lt.s32.totalorder %s50, 1
    %s52 = scalar_select %p51, %s50, 1
    %s53 = smul.addr %s52, 8
    %s54 = scalar_lea.vmem %s1, %s53
    %s55 = sadd.s32 0, 0
    %s56 = smul.u32 2, %s55
    %p57 = scmp.eq.s32.totalorder 0, 0
    // Predicated region
    $region14: #{tpu_custom_call.1} parent=1 // pred_check
      %p58 = pneg %p57
    $region15: #{tpu_custom_call.1} parent=1 // pred_check_branch
      %60 = sbr.rel (%p58) target = $region17
    $region16: #{tpu_custom_call.1} parent=1 // pred_region
      %vm61 = vcmask 0
      %62 = vst.msk [vmem:[#allocation5] sm:$0x1] %vm61, 0.0
      %63 = vst.msk [vmem:[#allocation6] sm:$0x1] %vm61, 0.0
    $region17: #{tpu_custom_call.1} parent=1 // pred_fallthru
      _
    %v64 = vld [vmem:[#allocation2] sm:$0xff]
    %v65 = vld [vmem:[#allocation2 + $0x8] sm:$0xff]
    %s66 = scalar_lea.vmem [#allocation2], 16
    %v67 = vld [vmem:[%s66] sm:$0xff]
    %v68 = vld [vmem:[%s66 + $0x8] sm:$0xff]
    %v69 = vld [vmem:[%s54] sm:$0xff]
    %v70 = vld [vmem:[%s54 + $0x8] sm:$0xff]
    %v71 = vmul.f32 %v64, %v64
    %v72 = vmul.f32 %v65, %v65
    %vm73 = vcmask 261120
    %v74 = vsel %vm73, %v71, 0.0
    %75 = vadd.xlane.f32.xlu0 %v74
    %v76 = vpop.xlane.xlu0 %75
    %v77 = vsel %vm73, %v72, 0.0
    %78 = vadd.xlane.f32.xlu0 %v77
    %v79 = vpop.xlane.xlu0 %78
    %v80 = vmul.f32 %v67, %v67
    %v81 = vmul.f32 %v68, %v68
    %v82 = vsel %vm73, %v80, 0.0
    %83 = vadd.xlane.f32.xlu0 %v82
    %v84 = vpop.xlane.xlu0 %83
    %v85 = vsel %vm73, %v81, 0.0
    %86 = vadd.xlane.f32.xlu0 %v85
    %v87 = vpop.xlane.xlu0 %86
    %v88 = vmul.f32 %v64, %v67
    %v89 = vmul.f32 %v65, %v68
    %v90 = vsel %vm73, %v88, 0.0
    %91 = vadd.xlane.f32.xlu0 %v90
    %v92 = vpop.xlane.xlu0 %91
    %v93 = vsel %vm73, %v89, 0.0
    %94 = vadd.xlane.f32.xlu0 %v93
    %v95 = vpop.xlane.xlu0 %94
    %vm96 = vcmp.ge.f32.partialorder %v76, 1e-24
    %vm97 = vcmp.ge.f32.partialorder %v79, 1e-24
    %v98 = vmul.f32 %v76, 1e+24
    %v99 = vmul.f32 %v79, 1e+24
    %v100 = vsel %vm96, 1.0, %v98
    %v101 = vsel %vm97, 1.0, %v99
    %vm102 = vcmp.ge.f32.partialorder %v84, 1e-24
    %vm103 = vcmp.ge.f32.partialorder %v87, 1e-24
    %v104 = vmul.f32 %v84, 1e+24
    %v105 = vmul.f32 %v87, 1e+24
    %v106 = vsel %vm102, 1.0, %v104
    %v107 = vsel %vm103, 1.0, %v105
    %v108 = vmax.f32 %v76, 1e-24
    %v109 = vmax.f32 %v79, 1e-24
    %v110 = vrsqrt.pop %v108
    %v111 = vrsqrt.pop %v109
    %v112 = vmax.f32 %v84, 1e-24
    %v113 = vmax.f32 %v87, 1e-24
    %v114 = vrsqrt.pop %v112
    %v115 = vrsqrt.pop %v113
    %v116 = vadd.f32 %v100, %v106
    %v117 = vadd.f32 %v101, %v107
    %v118 = vmul.f32 %v92, 2.0
    %v119 = vmul.f32 %v95, 2.0
    %v120 = vmul.f32 %v110, %v114
    %v121 = vmul.f32 %v111, %v115
    %v122 = vmul.f32 %v118, %v120
    %v123 = vmul.f32 %v119, %v121
    %v124 = vsub.f32 %v116, %v122
    %v125 = vsub.f32 %v117, %v123
    %v126 = vmax.f32 %v124, 0.0
    %v127 = vmax.f32 %v125, 0.0
    %v128 = vadd.f32 %v126, 1e-06
    %v129 = vadd.f32 %v127, 1e-06
    %v130 = vrsqrt.pop %v128
    %v131 = vmul.f32 %v128, %v130
    %vm132 = vcmp.eq.f32.partialorder %v128, inf
    %v133 = vsel %vm132, %v128, %v131
    %vm134 = vcmp.eq.f32.partialorder %v128, 0.0
    %v135 = vand.u32 %v128, 2147483648
    %v136 = vsel %vm134, %v135, %v133
    %v137 = vrsqrt.pop %v129
    %v138 = vmul.f32 %v129, %v137
    %vm139 = vcmp.eq.f32.partialorder %v129, inf
    %v140 = vsel %vm139, %v129, %v138
    %vm141 = vcmp.eq.f32.partialorder %v129, 0.0
    %v142 = vand.u32 %v129, 2147483648
    %v143 = vsel %vm141, %v142, %v140
    %v144 = vmul.f32 %v69, %v126
    %v145 = vmul.f32 %v70, %v127
    %v146 = vsub.f32 1.0, %v69
    %v147 = vsub.f32 1.0, %v70
    %v148 = vsub.f32 1.0, %v136
    %v149 = vsub.f32 1.0, %v143
    %v150 = vmax.f32 %v148, 0.0
    %v151 = vmax.f32 %v149, 0.0
    %v152 = vmul.f32 %v150, %v150
    %v153 = vmul.f32 %v151, %v151
    %v154 = vmul.f32 %v146, %v152
    %v155 = vmul.f32 %v147, %v153
    %v156 = vld [vmem:[#allocation5] sm:$0x1]
    %vm157 = vcmask 7168
    %v158 = vsel %vm157, %v144, 0.0
    %v159 = vsel %vm157, %v145, 0.0
    %v160 = vadd.f32 %v158, %v159
    %161 = vadd.xlane.f32.xlu0 %v160
    %v162 = vpop.xlane.xlu0 %161
    %v163 = vrot.slane %v162, 4
    %v164 = vadd.f32 %v162, %v163
    %v165 = vrot.slane %v164, 2
    %v166 = vadd.f32 %v164, %v165
    %v167 = vrot.slane %v166, 1
    %v168 = vadd.f32 %v166, %v167
    %s169 = vtos %v168
    %v170 = vstv %s169
    %v171 = vadd.f32 %v156, %v170
    %vm172 = vcmask 0
    %173 = vst.msk [vmem:[#allocation5] sm:$0x1] %vm172, %v171
    %v174 = vld [vmem:[#allocation6] sm:$0x1]
    %v175 = vsel %vm157, %v154, 0.0
    %v176 = vsel %vm157, %v155, 0.0
    %v177 = vadd.f32 %v175, %v176
    %178 = vadd.xlane.f32.xlu0 %v177
    %v179 = vpop.xlane.xlu0 %178
    %v180 = vrot.slane %v179, 4
    %v181 = vadd.f32 %v179, %v180
    %v182 = vrot.slane %v181, 2
    %v183 = vadd.f32 %v181, %v182
    %v184 = vrot.slane %v183, 1
    %v185 = vadd.f32 %v183, %v184
    %s186 = vtos %v185
    %v187 = vstv %s186
    %v188 = vadd.f32 %v174, %v187
    %189 = vst.msk [vmem:[#allocation6] sm:$0x1] %vm172, %v188
    // Predicated region
    $region18: #{tpu_custom_call.1} parent=1 // pred_check
      _
    $region19: #{tpu_custom_call.1} parent=1 // pred_check_branch
      %191 = sbr.rel (0) target = $region21
    $region20: #{tpu_custom_call.1} parent=1 // pred_region
      %s193 = ssub.s32 16, 16
      %194 = vsyncadd [#allocation4], %s193
      %s196 = sshll.u32 [#allocation5], 4
      %s197 = int_to_ptr.vmem [resolvable:$true] %s196
      %199 = dma.vmem_to_hbm [thread:$0]  %s197, 16, %s2, [#allocation4]
    $region21: #{tpu_custom_call.1} parent=1 // pred_fallthru
      _
    // Predicated region
    $region22: #{tpu_custom_call.1} parent=1 // pred_check
      _
    $region23: #{tpu_custom_call.1} parent=1 // pred_check_branch
      %201 = sbr.rel (0) target = $region25
    $region24: #{tpu_custom_call.1} parent=1 // pred_region
      %s203 = ssub.s32 16, 16
      %204 = vsyncadd [#allocation7], %s203
      %s206 = sshll.u32 [#allocation6], 4
      %s207 = int_to_ptr.vmem [resolvable:$true] %s206
      %209 = dma.vmem_to_hbm [thread:$0]  %s207, 16, %s3, [#allocation7]
    $region25: #{tpu_custom_call.1} parent=1 // pred_fallthru
      _
    // Predicated region
    $region26: #{tpu_custom_call.1} parent=1 // pred_check
      _
    $region27: #{tpu_custom_call.1} parent=1 // pred_check_branch
      %211 = sbr.rel (0) target = $region29
    $region28: #{tpu_custom_call.1} parent=1 // pred_region
      %212 = dma.done [#allocation4], 16
    $region29: #{tpu_custom_call.1} parent=1 // pred_fallthru
      _
    // Predicated region
    $region30: #{tpu_custom_call.1} parent=1 // pred_check
      _
    $region31: #{tpu_custom_call.1} parent=1 // pred_check_branch
      %214 = sbr.rel (0) target = $region33
    $region32: #{tpu_custom_call.1} parent=1 // pred_region
      %215 = dma.done [#allocation7], 16
    $region33: #{tpu_custom_call.1} parent=1 // pred_fallthru
      _
    %216 = vsyncpa [#allocation3], 1
    %217 = vsyncpa [#allocation4], 1
    %218 = vsyncpa [#allocation7], 1

</llo_original>
